<compile_context>
chip_gen: v7x
topology: tpu7x:2x2x1
jax: 0.10.0
libtpu: 0.0.40
codegen_flags: <defaults>
</compile_context>

<pallas_src>
import math

import jax
import jax.numpy as jnp
from jax.experimental import pallas as pl
from jax.experimental.pallas import tpu as pltpu

LANE = 128  # TPU vreg lane width (padding target for the hidden dim)


def _mlp_kernel(x_ref,
                w1_ref, b1_ref,
                w2_ref, b2_ref,
                w3_ref, b3_ref,
                w4_ref, b4_ref,
                w5_ref, b5_ref,
                o_ref):
    # Layer 1: (tile_b, 4) @ (4, 128).  K=4 under-fills the MXU, but layer 1
    # is not the bottleneck; keeping x at its real width is the HBM win.
    h = jnp.dot(x_ref[...], w1_ref[...], preferred_element_type=jnp.float32)
    h = jnp.tanh(h + b1_ref[...])
    # Layers 2-4: 128-wide padded hidden (padded lanes stay exactly 0).
    h = jnp.dot(h, w2_ref[...], preferred_element_type=jnp.float32)
    h = jnp.tanh(h + b2_ref[...])
    h = jnp.dot(h, w3_ref[...], preferred_element_type=jnp.float32)
    h = jnp.tanh(h + b3_ref[...])
    h = jnp.dot(h, w4_ref[...], preferred_element_type=jnp.float32)
    h = jnp.tanh(h + b4_ref[...])
    # Layer 5: (tile_b, 128) @ (128, 2) -> only the 2 real lanes are stored.
    out = jnp.dot(h, w5_ref[...], preferred_element_type=jnp.float32)
    o_ref[...] = (out + b5_ref[...]).astype(o_ref.dtype)


def _xavier_uniform(key, in_features, out_features, dtype=jnp.float32):
    """Matches torch.nn.init.xavier_uniform_ (gain=1)."""
    bound = math.sqrt(6.0 / (in_features + out_features))
    # PyTorch weight shape is (out, in); return it transposed to (in, out) for
    # the x @ W convention used in the kernel.
    w = jax.random.uniform(key, (out_features, in_features), dtype=dtype,
                           minval=-bound, maxval=bound)
    return w.T


def init_params(key, hidden_dim=50, in_dim=4, out_dim=2, dtype=jnp.float32):
    dims = [(in_dim, hidden_dim),
            (hidden_dim, hidden_dim),
            (hidden_dim, hidden_dim),
            (hidden_dim, hidden_dim),
            (hidden_dim, out_dim)]
    keys = jax.random.split(key, len(dims))
    params = []
    for k, (fan_in, fan_out) in zip(keys, dims):
        w = _xavier_uniform(k, fan_in, fan_out, dtype)       # (in, out)
        b = jnp.full((1, fan_out), 0.01, dtype=dtype)        # bias = 0.01
        params.append((w, b))
    return params


def _round_up(x, m):
    return pl.cdiv(x, m) * m


def _pad_to(a, rows, cols):
    return jnp.pad(a, ((0, rows - a.shape[0]), (0, cols - a.shape[1])))


def five_layer_tanh_forward(x, params, *, tile_b=2048):
    """Pallas forward pass of FiveLayerTanhNeuralNetwork."""
    # nn.Flatten(): flatten everything but the batch dimension.
    x = x.reshape(x.shape[0], -1)
    batch, in_dim = x.shape
    out_dim = params[-1][0].shape[1]

    # --- pad ONLY the hidden feature dims to the 128-lane width --------------
    # Padded weight rows/cols and bias lanes are exactly zero, so padded
    # activation lanes stay zero through tanh and never leak into real lanes.
    (w1, b1), *mid, (w5, b5) = params
    flat_wb = [_pad_to(w1, in_dim, LANE), _pad_to(b1, 1, LANE)]     # (4,128)
    for w, b in mid:
        flat_wb += [_pad_to(w, LANE, LANE), _pad_to(b, 1, LANE)]    # (128,128)
    flat_wb += [_pad_to(w5, LANE, out_dim), _pad_to(b5, 1, out_dim)]  # (128,2)

    # --- batch tiling ---------------------------------------------------------
    tile_b = int(min(tile_b, _round_up(batch, 8)))   # (8,128) sublane rule
    b_pad = int(_round_up(batch, tile_b))
    # Ensure >=2 grid steps when possible so v7x's two TensorCores both get
    # work on the "parallel" batch axis (grid==1 means b_pad == tile_b here).
    if b_pad // tile_b < 2 and b_pad >= 16 and b_pad % 16 == 0:
        tile_b = b_pad // 2                          # stays a multiple of 8
    if b_pad != batch:
        x = jnp.pad(x, ((0, b_pad - batch), (0, 0)))

    grid = (b_pad // tile_b,)
    x_spec = pl.BlockSpec((tile_b, in_dim), lambda i: (i, 0))
    o_spec = pl.BlockSpec((tile_b, out_dim), lambda i: (i, 0))
    # Weights/biases: constant block index -> VMEM-resident across grid steps.
    in_specs = [x_spec] + [pl.BlockSpec(arr.shape, lambda i: (0, 0))
                           for arr in flat_wb]

    out = pl.pallas_call(
        _mlp_kernel,
        out_shape=jax.ShapeDtypeStruct((b_pad, out_dim), x.dtype),
        grid=grid,
        in_specs=in_specs,
        out_specs=o_spec,
        compiler_params=pltpu.CompilerParams(
            dimension_semantics=("parallel",)),   # megacore batch split on v7x
    )(x, *flat_wb)

    return out[:batch]


def five_layer_tanh_reference(x, params):
    """Pure-JAX reference for correctness checking."""
    h = x.reshape(x.shape[0], -1)
    for i, (w, b) in enumerate(params):
        h = h @ w + b
        if i < len(params) - 1:
            h = jnp.tanh(h)
    return h


if __name__ == "__main__":
    key = jax.random.PRNGKey(0)
    key_x, key_x2, key_p = jax.random.split(key, 3)

    in_dim, hidden_dim, out_dim = 4, 50, 2
    params = init_params(key_p, hidden_dim=hidden_dim, in_dim=in_dim,
                         out_dim=out_dim)

    # Case 1: batch multiple of 16 -> exercises the >=2-grid-step (megacore)
    # path (tile_b becomes 32, grid=(2,)).
    x1 = jax.random.normal(key_x, (64, in_dim), dtype=jnp.float32)
    out1 = jax.block_until_ready(five_layer_tanh_forward(x1, params))
    ref1 = five_layer_tanh_reference(x1, params)
    assert out1.shape == (64, out_dim), out1.shape
    assert jnp.allclose(out1, ref1, atol=1e-4, rtol=1e-4), (
        "Pallas output does not match reference (case 1)")

    # Case 2: ragged batch (not a multiple of 8) -> exercises batch padding.
    x2 = jax.random.normal(key_x2, (50, in_dim), dtype=jnp.float32)
    out2 = jax.block_until_ready(five_layer_tanh_forward(x2, params))
    ref2 = five_layer_tanh_reference(x2, params)
    assert out2.shape == (50, out_dim), out2.shape
    assert jnp.allclose(out2, ref2, atol=1e-4, rtol=1e-4), (
        "Pallas output does not match reference (case 2)")

    print("KERNEL_OK")
</pallas_src>

<mosaic_0001>
module attributes {stable_mosaic.version = 11 : i64} {
  func.func @_mlp_kernel(%arg0: i32, %arg1: memref<32x4xf32, #tpu.memory_space<vmem>>, %arg2: memref<4x128xf32, #tpu.memory_space<vmem>>, %arg3: memref<1x128xf32, #tpu.memory_space<vmem>>, %arg4: memref<128x128xf32, #tpu.memory_space<vmem>>, %arg5: memref<1x128xf32, #tpu.memory_space<vmem>>, %arg6: memref<128x128xf32, #tpu.memory_space<vmem>>, %arg7: memref<1x128xf32, #tpu.memory_space<vmem>>, %arg8: memref<128x128xf32, #tpu.memory_space<vmem>>, %arg9: memref<1x128xf32, #tpu.memory_space<vmem>>, %arg10: memref<128x2xf32, #tpu.memory_space<vmem>>, %arg11: memref<1x2xf32, #tpu.memory_space<vmem>>, %arg12: memref<32x2xf32, #tpu.memory_space<vmem>>) attributes {dimension_semantics = [#tpu.dimension_semantics<parallel>], iteration_bounds = array<i64: 2>, scalar_prefetch = 0 : i64, scratch_operands = 0 : i64, tpu.core_type = #tpu.core_type<tc>, window_params = [{transform_indices = @transform_0, window_bounds = array<i64: 32, 4>}, {pipeline_mode = #tpu.pipeline_mode<synchronous>, transform_indices = @transform_1, window_bounds = array<i64: 4, 128>}, {pipeline_mode = #tpu.pipeline_mode<synchronous>, transform_indices = @transform_2, window_bounds = array<i64: 1, 128>}, {pipeline_mode = #tpu.pipeline_mode<synchronous>, transform_indices = @transform_3, window_bounds = array<i64: 128, 128>}, {pipeline_mode = #tpu.pipeline_mode<synchronous>, transform_indices = @transform_4, window_bounds = array<i64: 1, 128>}, {pipeline_mode = #tpu.pipeline_mode<synchronous>, transform_indices = @transform_5, window_bounds = array<i64: 128, 128>}, {pipeline_mode = #tpu.pipeline_mode<synchronous>, transform_indices = @transform_6, window_bounds = array<i64: 1, 128>}, {pipeline_mode = #tpu.pipeline_mode<synchronous>, transform_indices = @transform_7, window_bounds = array<i64: 128, 128>}, {pipeline_mode = #tpu.pipeline_mode<synchronous>, transform_indices = @transform_8, window_bounds = array<i64: 1, 128>}, {pipeline_mode = #tpu.pipeline_mode<synchronous>, transform_indices = @transform_9, window_bounds = array<i64: 128, 2>}, {pipeline_mode = #tpu.pipeline_mode<synchronous>, transform_indices = @transform_10, window_bounds = array<i64: 1, 2>}, {transform_indices = @transform_11, window_bounds = array<i64: 32, 2>}]} {
    %c0 = arith.constant 0 : index
    %c0_0 = arith.constant 0 : index
    %0 = vector.load %arg1[%c0, %c0_0] : memref<32x4xf32, #tpu.memory_space<vmem>>, vector<32x4xf32>
    %c0_1 = arith.constant 0 : index
    %c0_2 = arith.constant 0 : index
    %1 = vector.load %arg2[%c0_1, %c0_2] : memref<4x128xf32, #tpu.memory_space<vmem>>, vector<4x128xf32>
    %cst = arith.constant dense<0.000000e+00> : vector<32x128xf32>
    %2 = tpu.matmul %0, %1, %cst {dimension_numbers = #tpu.dot_dimension_numbers<[1], [0], [0], [1], [0, 0, 1, 1], [], []>} : vector<32x4xf32>, vector<4x128xf32>, vector<32x128xf32> -> vector<32x128xf32>
    %c0_3 = arith.constant 0 : index
    %c0_4 = arith.constant 0 : index
    %3 = vector.load %arg3[%c0_3, %c0_4] : memref<1x128xf32, #tpu.memory_space<vmem>>, vector<1x128xf32>
    %4 = vector.broadcast %3 : vector<1x128xf32> to vector<32x128xf32>
    %5 = arith.addf %2, %4 : vector<32x128xf32>
    %6 = math.tanh %5 : vector<32x128xf32>
    %c0_5 = arith.constant 0 : index
    %c0_6 = arith.constant 0 : index
    %7 = vector.load %arg4[%c0_5, %c0_6] : memref<128x128xf32, #tpu.memory_space<vmem>>, vector<128x128xf32>
    %cst_7 = arith.constant dense<0.000000e+00> : vector<32x128xf32>
    %8 = tpu.matmul %6, %7, %cst_7 {dimension_numbers = #tpu.dot_dimension_numbers<[1], [0], [0], [1], [0, 0, 1, 1], [], []>} : vector<32x128xf32>, vector<128x128xf32>, vector<32x128xf32> -> vector<32x128xf32>
    %c0_8 = arith.constant 0 : index
    %c0_9 = arith.constant 0 : index
    %9 = vector.load %arg5[%c0_8, %c0_9] : memref<1x128xf32, #tpu.memory_space<vmem>>, vector<1x128xf32>
    %10 = vector.broadcast %9 : vector<1x128xf32> to vector<32x128xf32>
    %11 = arith.addf %8, %10 : vector<32x128xf32>
    %12 = math.tanh %11 : vector<32x128xf32>
    %c0_10 = arith.constant 0 : index
    %c0_11 = arith.constant 0 : index
    %13 = vector.load %arg6[%c0_10, %c0_11] : memref<128x128xf32, #tpu.memory_space<vmem>>, vector<128x128xf32>
    %cst_12 = arith.constant dense<0.000000e+00> : vector<32x128xf32>
    %14 = tpu.matmul %12, %13, %cst_12 {dimension_numbers = #tpu.dot_dimension_numbers<[1], [0], [0], [1], [0, 0, 1, 1], [], []>} : vector<32x128xf32>, vector<128x128xf32>, vector<32x128xf32> -> vector<32x128xf32>
    %c0_13 = arith.constant 0 : index
    %c0_14 = arith.constant 0 : index
    %15 = vector.load %arg7[%c0_13, %c0_14] : memref<1x128xf32, #tpu.memory_space<vmem>>, vector<1x128xf32>
    %16 = vector.broadcast %15 : vector<1x128xf32> to vector<32x128xf32>
    %17 = arith.addf %14, %16 : vector<32x128xf32>
    %18 = math.tanh %17 : vector<32x128xf32>
    %c0_15 = arith.constant 0 : index
    %c0_16 = arith.constant 0 : index
    %19 = vector.load %arg8[%c0_15, %c0_16] : memref<128x128xf32, #tpu.memory_space<vmem>>, vector<128x128xf32>
    %cst_17 = arith.constant dense<0.000000e+00> : vector<32x128xf32>
    %20 = tpu.matmul %18, %19, %cst_17 {dimension_numbers = #tpu.dot_dimension_numbers<[1], [0], [0], [1], [0, 0, 1, 1], [], []>} : vector<32x128xf32>, vector<128x128xf32>, vector<32x128xf32> -> vector<32x128xf32>
    %c0_18 = arith.constant 0 : index
    %c0_19 = arith.constant 0 : index
    %21 = vector.load %arg9[%c0_18, %c0_19] : memref<1x128xf32, #tpu.memory_space<vmem>>, vector<1x128xf32>
    %22 = vector.broadcast %21 : vector<1x128xf32> to vector<32x128xf32>
    %23 = arith.addf %20, %22 : vector<32x128xf32>
    %24 = math.tanh %23 : vector<32x128xf32>
    %c0_20 = arith.constant 0 : index
    %c0_21 = arith.constant 0 : index
    %25 = vector.load %arg10[%c0_20, %c0_21] : memref<128x2xf32, #tpu.memory_space<vmem>>, vector<128x2xf32>
    %cst_22 = arith.constant dense<0.000000e+00> : vector<32x2xf32>
    %26 = tpu.matmul %24, %25, %cst_22 {dimension_numbers = #tpu.dot_dimension_numbers<[1], [0], [0], [1], [0, 0, 1, 1], [], []>} : vector<32x128xf32>, vector<128x2xf32>, vector<32x2xf32> -> vector<32x2xf32>
    %c0_23 = arith.constant 0 : index
    %c0_24 = arith.constant 0 : index
    %27 = vector.load %arg11[%c0_23, %c0_24] : memref<1x2xf32, #tpu.memory_space<vmem>>, vector<1x2xf32>
    %28 = vector.broadcast %27 : vector<1x2xf32> to vector<32x2xf32>
    %29 = arith.addf %26, %28 : vector<32x2xf32>
    %c0_25 = arith.constant 0 : index
    %c0_26 = arith.constant 0 : index
    %30 = vector.load %arg12[%c0_25, %c0_26] : memref<32x2xf32, #tpu.memory_space<vmem>>, vector<32x2xf32>
    tpu.vector_store %arg12[%c0_25, %c0_26], %29 {strides = array<i32>} : memref<32x2xf32, #tpu.memory_space<vmem>>, vector<32x2xf32>,
    return
  }
  func.func @transform_0(%arg0: i32) -> (i32, i32) {
    %c0_i32 = arith.constant 0 : i32
    %c0_i32_0 = arith.constant 0 : i32
    return %arg0, %c0_i32 : i32, i32
  }
  func.func @transform_1(%arg0: i32) -> (i32, i32) {
    %c0_i32 = arith.constant 0 : i32
    %c0_i32_0 = arith.constant 0 : i32
    %c0_i32_1 = arith.constant 0 : i32
    return %c0_i32, %c0_i32_0 : i32, i32
  }
  func.func @transform_2(%arg0: i32) -> (i32, i32) {
    %c0_i32 = arith.constant 0 : i32
    %c0_i32_0 = arith.constant 0 : i32
    %c0_i32_1 = arith.constant 0 : i32
    return %c0_i32, %c0_i32_0 : i32, i32
  }
  func.func @transform_3(%arg0: i32) -> (i32, i32) {
    %c0_i32 = arith.constant 0 : i32
    %c0_i32_0 = arith.constant 0 : i32
    %c0_i32_1 = arith.constant 0 : i32
    return %c0_i32, %c0_i32_0 : i32, i32
  }
  func.func @transform_4(%arg0: i32) -> (i32, i32) {
    %c0_i32 = arith.constant 0 : i32
    %c0_i32_0 = arith.constant 0 : i32
    %c0_i32_1 = arith.constant 0 : i32
    return %c0_i32, %c0_i32_0 : i32, i32
  }
  func.func @transform_5(%arg0: i32) -> (i32, i32) {
    %c0_i32 = arith.constant 0 : i32
    %c0_i32_0 = arith.constant 0 : i32
    %c0_i32_1 = arith.constant 0 : i32
    return %c0_i32, %c0_i32_0 : i32, i32
  }
  func.func @transform_6(%arg0: i32) -> (i32, i32) {
    %c0_i32 = arith.constant 0 : i32
    %c0_i32_0 = arith.constant 0 : i32
    %c0_i32_1 = arith.constant 0 : i32
    return %c0_i32, %c0_i32_0 : i32, i32
  }
  func.func @transform_7(%arg0: i32) -> (i32, i32) {
    %c0_i32 = arith.constant 0 : i32
    %c0_i32_0 = arith.constant 0 : i32
    %c0_i32_1 = arith.constant 0 : i32
    return %c0_i32, %c0_i32_0 : i32, i32
  }
  func.func @transform_8(%arg0: i32) -> (i32, i32) {
    %c0_i32 = arith.constant 0 : i32
    %c0_i32_0 = arith.constant 0 : i32
    %c0_i32_1 = arith.constant 0 : i32
    return %c0_i32, %c0_i32_0 : i32, i32
  }
  func.func @transform_9(%arg0: i32) -> (i32, i32) {
    %c0_i32 = arith.constant 0 : i32
    %c0_i32_0 = arith.constant 0 : i32
    %c0_i32_1 = arith.constant 0 : i32
    return %c0_i32, %c0_i32_0 : i32, i32
  }
  func.func @transform_10(%arg0: i32) -> (i32, i32) {
    %c0_i32 = arith.constant 0 : i32
    %c0_i32_0 = arith.constant 0 : i32
    %c0_i32_1 = arith.constant 0 : i32
    return %c0_i32, %c0_i32_0 : i32, i32
  }
  func.func @transform_11(%arg0: i32) -> (i32, i32) {
    %c0_i32 = arith.constant 0 : i32
    %c0_i32_0 = arith.constant 0 : i32
    return %arg0, %c0_i32 : i32, i32
  }
}

</mosaic_0001>

<llo_original>
// kernel: tpu_custom_call.1
$region0: #{tpu_custom_call.1}
  #allocation0 [shape = 'u32[]', space=smem, size = 0x4, offset = 0x4, fixed_abs, tag = 'smem constant byte address 0x4 - core index']
  #allocation1 [shape = 'u32[144,128]{1,0:T(1,128)}', space=vmem, size = 0x12000, scoped, tag = 'internal scratch']
  %s0 = inlined_call_operand.vmem [shape: f32[64,4], index: 0, kind: input, shape index: {}]
  %s1 = inlined_call_operand.vmem [shape: f32[4,128], index: 1, kind: input, shape index: {}]
  %s2 = inlined_call_operand.vmem [shape: f32[1,128], index: 2, kind: input, shape index: {}]
  %s3 = inlined_call_operand.vmem [shape: f32[128,128], index: 3, kind: input, shape index: {}]
  %s4 = inlined_call_operand.vmem [shape: f32[1,128], index: 4, kind: input, shape index: {}]
  %s5 = inlined_call_operand.hbm [shape: f32[128,128], index: 5, kind: input, shape index: {}]
  %s6 = inlined_call_operand.vmem [shape: f32[1,128], index: 6, kind: input, shape index: {}]
  %s7 = inlined_call_operand.hbm [shape: f32[128,128], index: 7, kind: input, shape index: {}]
  %s8 = inlined_call_operand.vmem [shape: f32[1,128], index: 8, kind: input, shape index: {}]
  %s9 = inlined_call_operand.vmem [shape: f32[128,2], index: 9, kind: input, shape index: {}]
  %s10 = inlined_call_operand.vmem [shape: f32[1,2], index: 10, kind: input, shape index: {}]
  %s11 = inlined_call_operand.vmem [shape: f32[64,2], index: 11, kind: output, shape index: {}]
  %s12 = sld [smem:[#allocation0]]
  $region85: #{tpu_custom_call.1} parent=0
    _
  %s14 = ssub.s32 1, %s12
  %s15 = scalar_select 0, %s14, %s12
  $region1: #{tpu_custom_call.1} parent=0
    #allocation2 [shape = 'u8[65536]{0}', space=vmem, size = 0x10000, scoped, tag = 'input window, operand 5, single buffered']
    #allocation3 [shape = 's32[2]{0}', space=sflag, size = 0x8, scoped, tag = 'scoped memory for tpu_custom_call.1']
    #allocation4 [shape = 'u8[65536]{0}', space=vmem, size = 0x10000, scoped, tag = 'input window, operand 7, single buffered']
    #allocation5 [shape = 's32[1]{0}', space=sflag, size = 0x4, scoped, tag = 'scoped memory for tpu_custom_call.1']
    %16 = vsyncpa [#allocation3], 0
    %17 = vsyncpa [#allocation5], 0
    loop: start=0, step=1, limit=4
    $region2: #{tpu_custom_call.1} parent=1 // loop_pre_header
      _
    $region3: #{tpu_custom_call.1} parent=1 // loop_header
      %s19 = sphi 0, %s23
      %p20 = scmp.ge.s32.totalorder %s19, 4
      %s29 = sphi 0, %s31
      %s32 = sphi 0, %s29
      %s33 = sphi 0, %s32
      %s49 = sphi 0, %s33
      %s53 = sphi 0, %s53
      %s55 = sphi 0, %s53
      %s56 = sphi 0, %s55
      %s70 = sphi 0, %s56
      %s74 = sphi 0, %s74
      %s76 = sphi 0, %s74
      %s77 = sphi 0, %s76
      %s91 = sphi 0, %s77
      %s95 = sphi 0, %s95
      %s97 = sphi 0, %s95
      %s98 = sphi 0, %s97
      %s112 = sphi 0, %s98
      %s116 = sphi 0, %s116
      %s118 = sphi 0, %s116
      %s119 = sphi 0, %s118
      %s133 = sphi 0, %s119
      %s137 = sphi 0, %s137
      %s139 = sphi 0, %s137
      %s140 = sphi 0, %s139
      %s154 = sphi 0, %s140
      %s158 = sphi 0, %s158
      %s160 = sphi 0, %s158
      %s161 = sphi 0, %s160
      %s175 = sphi 0, %s161
      %s179 = sphi 0, %s179
      %s181 = sphi 0, %s179
      %s182 = sphi 0, %s181
      %s196 = sphi 0, %s182
      %s200 = sphi 0, %s200
      %s202 = sphi 0, %s200
      %s203 = sphi 0, %s202
      %s217 = sphi 0, %s203
      %s221 = sphi 0, %s221
      %s223 = sphi 0, %s221
      %s224 = sphi 0, %s223
      %s238 = sphi 0, %s224
      %s242 = sphi 0, %s242
      %s244 = sphi 0, %s242
      %s245 = sphi 0, %s244
      %s259 = sphi 0, %s245
      %s265 = sphi 0, %s267
      %s268 = sphi 0, %s265
      %s269 = sphi 0, %s268
      %s285 = sphi 0, %s269
    $region4: #{tpu_custom_call.1} parent=1 // loop_header_branch
      %22 = sbr.rel (%p20) target = $region8
    $region5: #{tpu_custom_call.1} parent=1 // loop_body
      %s24 = ssub.s32 %s19, 1
      %s25 = ssub.s32 %s19, 2
      %s26 = sadd.s32 %s19, 1
      %s27 = ssub.s32 %s19, %s26
      %p28 = scmp.eq.s32.totalorder %s27, 0
      %s30 = sadd.s32 %s29, 1
      %s31 = scalar_select %p28, %s29, %s30
      %p34 = pneg %p28
      %p35 = scmp.eq.s32.totalorder %s19, 1
      %p36 = por %p34, %p35
      %p37 = scmp.ne.s32.totalorder %s29, %s32
      %p38 = scmp.eq.s32.totalorder %s19, 0
      %p39 = por %p37, %p38
      %p40 = scmp.ne.s32.totalorder %s29, %s32
      %p41 = scmp.eq.s32.totalorder %s24, 1
      %p42 = por %p40, %p41
      %p43 = scmp.ne.s32.totalorder %s32, %s33
      %p44 = scmp.eq.s32.totalorder %s24, 0
      %p45 = por %p43, %p44
      %p46 = scmp.ne.s32.totalorder %s32, %s33
      %p47 = scmp.eq.s32.totalorder %s25, 1
      %p48 = por %p46, %p47
      %p50 = scmp.ne.s32.totalorder %s33, %s49
      %p51 = scmp.eq.s32.totalorder %s25, 0
      %p52 = por %p50, %p51
      %s54 = sadd.s32 %s53, 1
      %p57 = scmp.eq.s32.totalorder %s19, 1
      %p58 = scmp.ne.s32.totalorder %s53, %s55
      %p59 = scmp.eq.s32.totalorder %s19, 0
      %p60 = por %p58, %p59
      %p61 = scmp.ne.s32.totalorder %s53, %s55
      %p62 = scmp.eq.s32.totalorder %s24, 1
      %p63 = por %p61, %p62
      %p64 = scmp.ne.s32.totalorder %s55, %s56
      %p65 = scmp.eq.s32.totalorder %s24, 0
      %p66 = por %p64, %p65
      %p67 = scmp.ne.s32.totalorder %s55, %s56
      %p68 = scmp.eq.s32.totalorder %s25, 1
      %p69 = por %p67, %p68
      %p71 = scmp.ne.s32.totalorder %s56, %s70
      %p72 = scmp.eq.s32.totalorder %s25, 0
      %p73 = por %p71, %p72
      %s75 = sadd.s32 %s74, 1
      %p78 = scmp.eq.s32.totalorder %s19, 1
      %p79 = scmp.ne.s32.totalorder %s74, %s76
      %p80 = scmp.eq.s32.totalorder %s19, 0
      %p81 = por %p79, %p80
      %p82 = scmp.ne.s32.totalorder %s74, %s76
      %p83 = scmp.eq.s32.totalorder %s24, 1
      %p84 = por %p82, %p83
      %p85 = scmp.ne.s32.totalorder %s76, %s77
      %p86 = scmp.eq.s32.totalorder %s24, 0
      %p87 = por %p85, %p86
      %p88 = scmp.ne.s32.totalorder %s76, %s77
      %p89 = scmp.eq.s32.totalorder %s25, 1
      %p90 = por %p88, %p89
      %p92 = scmp.ne.s32.totalorder %s77, %s91
      %p93 = scmp.eq.s32.totalorder %s25, 0
      %p94 = por %p92, %p93
      %s96 = sadd.s32 %s95, 1
      %p99 = scmp.eq.s32.totalorder %s19, 1
      %p100 = scmp.ne.s32.totalorder %s95, %s97
      %p101 = scmp.eq.s32.totalorder %s19, 0
      %p102 = por %p100, %p101
      %p103 = scmp.ne.s32.totalorder %s95, %s97
      %p104 = scmp.eq.s32.totalorder %s24, 1
      %p105 = por %p103, %p104
      %p106 = scmp.ne.s32.totalorder %s97, %s98
      %p107 = scmp.eq.s32.totalorder %s24, 0
      %p108 = por %p106, %p107
      %p109 = scmp.ne.s32.totalorder %s97, %s98
      %p110 = scmp.eq.s32.totalorder %s25, 1
      %p111 = por %p109, %p110
      %p113 = scmp.ne.s32.totalorder %s98, %s112
      %p114 = scmp.eq.s32.totalorder %s25, 0
      %p115 = por %p113, %p114
      %s117 = sadd.s32 %s116, 1
      %p120 = scmp.eq.s32.totalorder %s19, 1
      %p121 = scmp.ne.s32.totalorder %s116, %s118
      %p122 = scmp.eq.s32.totalorder %s19, 0
      %p123 = por %p121, %p122
      %p124 = scmp.ne.s32.totalorder %s116, %s118
      %p125 = scmp.eq.s32.totalorder %s24, 1
      %p126 = por %p124, %p125
      %p127 = scmp.ne.s32.totalorder %s118, %s119
      %p128 = scmp.eq.s32.totalorder %s24, 0
      %p129 = por %p127, %p128
      %p130 = scmp.ne.s32.totalorder %s118, %s119
      %p131 = scmp.eq.s32.totalorder %s25, 1
      %p132 = por %p130, %p131
      %p134 = scmp.ne.s32.totalorder %s119, %s133
      %p135 = scmp.eq.s32.totalorder %s25, 0
      %p136 = por %p134, %p135
      %s138 = sadd.s32 %s137, 1
      %p141 = scmp.eq.s32.totalorder %s19, 1
      %p142 = scmp.ne.s32.totalorder %s137, %s139
      %p143 = scmp.eq.s32.totalorder %s19, 0
      %p144 = por %p142, %p143
      %p145 = scmp.ne.s32.totalorder %s137, %s139
      %p146 = scmp.eq.s32.totalorder %s24, 1
      %p147 = por %p145, %p146
      %p148 = scmp.ne.s32.totalorder %s139, %s140
      %p149 = scmp.eq.s32.totalorder %s24, 0
      %p150 = por %p148, %p149
      %p151 = scmp.ne.s32.totalorder %s139, %s140
      %p152 = scmp.eq.s32.totalorder %s25, 1
      %p153 = por %p151, %p152
      %p155 = scmp.ne.s32.totalorder %s140, %s154
      %p156 = scmp.eq.s32.totalorder %s25, 0
      %p157 = por %p155, %p156
      %s159 = sadd.s32 %s158, 1
      %p162 = scmp.eq.s32.totalorder %s19, 1
      %p163 = scmp.ne.s32.totalorder %s158, %s160
      %p164 = scmp.eq.s32.totalorder %s19, 0
      %p165 = por %p163, %p164
      %p166 = scmp.ne.s32.totalorder %s158, %s160
      %p167 = scmp.eq.s32.totalorder %s24, 1
      %p168 = por %p166, %p167
      %p169 = scmp.ne.s32.totalorder %s160, %s161
      %p170 = scmp.eq.s32.totalorder %s24, 0
      %p171 = por %p169, %p170
      %p172 = scmp.ne.s32.totalorder %s160, %s161
      %p173 = scmp.eq.s32.totalorder %s25, 1
      %p174 = por %p172, %p173
      %p176 = scmp.ne.s32.totalorder %s161, %s175
      %p177 = scmp.eq.s32.totalorder %s25, 0
      %p178 = por %p176, %p177
      %s180 = sadd.s32 %s179, 1
      %p183 = scmp.eq.s32.totalorder %s19, 1
      %p184 = scmp.ne.s32.totalorder %s179, %s181
      %p185 = scmp.eq.s32.totalorder %s19, 0
      %p186 = por %p184, %p185
      %p187 = scmp.ne.s32.totalorder %s179, %s181
      %p188 = scmp.eq.s32.totalorder %s24, 1
      %p189 = por %p187, %p188
      %p190 = scmp.ne.s32.totalorder %s181, %s182
      %p191 = scmp.eq.s32.totalorder %s24, 0
      %p192 = por %p190, %p191
      %p193 = scmp.ne.s32.totalorder %s181, %s182
      %p194 = scmp.eq.s32.totalorder %s25, 1
      %p195 = por %p193, %p194
      %p197 = scmp.ne.s32.totalorder %s182, %s196
      %p198 = scmp.eq.s32.totalorder %s25, 0
      %p199 = por %p197, %p198
      %s201 = sadd.s32 %s200, 1
      %p204 = scmp.eq.s32.totalorder %s19, 1
      %p205 = scmp.ne.s32.totalorder %s200, %s202
      %p206 = scmp.eq.s32.totalorder %s19, 0
      %p207 = por %p205, %p206
      %p208 = scmp.ne.s32.totalorder %s200, %s202
      %p209 = scmp.eq.s32.totalorder %s24, 1
      %p210 = por %p208, %p209
      %p211 = scmp.ne.s32.totalorder %s202, %s203
      %p212 = scmp.eq.s32.totalorder %s24, 0
      %p213 = por %p211, %p212
      %p214 = scmp.ne.s32.totalorder %s202, %s203
      %p215 = scmp.eq.s32.totalorder %s25, 1
      %p216 = por %p214, %p215
      %p218 = scmp.ne.s32.totalorder %s203, %s217
      %p219 = scmp.eq.s32.totalorder %s25, 0
      %p220 = por %p218, %p219
      %s222 = sadd.s32 %s221, 1
      %p225 = scmp.eq.s32.totalorder %s19, 1
      %p226 = scmp.ne.s32.totalorder %s221, %s223
      %p227 = scmp.eq.s32.totalorder %s19, 0
      %p228 = por %p226, %p227
      %p229 = scmp.ne.s32.totalorder %s221, %s223
      %p230 = scmp.eq.s32.totalorder %s24, 1
      %p231 = por %p229, %p230
      %p232 = scmp.ne.s32.totalorder %s223, %s224
      %p233 = scmp.eq.s32.totalorder %s24, 0
      %p234 = por %p232, %p233
      %p235 = scmp.ne.s32.totalorder %s223, %s224
      %p236 = scmp.eq.s32.totalorder %s25, 1
      %p237 = por %p235, %p236
      %p239 = scmp.ne.s32.totalorder %s224, %s238
      %p240 = scmp.eq.s32.totalorder %s25, 0
      %p241 = por %p239, %p240
      %s243 = sadd.s32 %s242, 1
      %p246 = scmp.eq.s32.totalorder %s19, 1
      %p247 = scmp.ne.s32.totalorder %s242, %s244
      %p248 = scmp.eq.s32.totalorder %s19, 0
      %p249 = por %p247, %p248
      %p250 = scmp.ne.s32.totalorder %s242, %s244
      %p251 = scmp.eq.s32.totalorder %s24, 1
      %p252 = por %p250, %p251
      %p253 = scmp.ne.s32.totalorder %s244, %s245
      %p254 = scmp.eq.s32.totalorder %s24, 0
      %p255 = por %p253, %p254
      %p256 = scmp.ne.s32.totalorder %s244, %s245
      %p257 = scmp.eq.s32.totalorder %s25, 1
      %p258 = por %p256, %p257
      %p260 = scmp.ne.s32.totalorder %s245, %s259
      %p261 = scmp.eq.s32.totalorder %s25, 0
      %p262 = por %p260, %p261
      %s263 = ssub.s32 %s19, %s26
      %p264 = scmp.eq.s32.totalorder %s263, 0
      %s266 = sadd.s32 %s265, 1
      %s267 = scalar_select %p264, %s265, %s266
      %p270 = pneg %p264
      %p271 = scmp.eq.s32.totalorder %s19, 1
      %p272 = por %p270, %p271
      %p273 = scmp.ne.s32.totalorder %s265, %s268
      %p274 = scmp.eq.s32.totalorder %s19, 0
      %p275 = por %p273, %p274
      %p276 = scmp.ne.s32.totalorder %s265, %s268
      %p277 = scmp.eq.s32.totalorder %s24, 1
      %p278 = por %p276, %p277
      %p279 = scmp.ne.s32.totalorder %s268, %s269
      %p280 = scmp.eq.s32.totalorder %s24, 0
      %p281 = por %p279, %p280
      %p282 = scmp.ne.s32.totalorder %s268, %s269
      %p283 = scmp.eq.s32.totalorder %s25, 1
      %p284 = por %p282, %p283
      %p286 = scmp.ne.s32.totalorder %s269, %s285
      %p287 = scmp.eq.s32.totalorder %s25, 0
      %p288 = por %p286, %p287
      %p289 = scmp.le.s32.totalorder 1, %s19
      %p290 = scmp.lt.s32.totalorder %s19, 3
      %p291 = pnand %p289, %p290
      %p292 = pneg %p291
      // Predicated region
      $region9: #{tpu_custom_call.1} parent=5 // pred_check
        _
      $region10: #{tpu_custom_call.1} parent=5 // pred_check_branch
        %294 = sbr.rel (%p291) target = $region12
      $region11: #{tpu_custom_call.1} parent=5 // pred_region
        %s295 = ssub.s32 %s19, 1
        // Predicated region
        $region13: #{tpu_custom_call.1} parent=11 // pred_check
          %p296 = pneg %p66
        $region14: #{tpu_custom_call.1} parent=11 // pred_check_branch
          %298 = sbr.rel (%p296) target = $region16
        $region15: #{tpu_custom_call.1} parent=11 // pred_region
          _
        $region16: #{tpu_custom_call.1} parent=11 // pred_fallthru
          _
        // Predicated region
        $region17: #{tpu_custom_call.1} parent=11 // pred_check
          %p299 = pneg %p87
        $region18: #{tpu_custom_call.1} parent=11 // pred_check_branch
          %301 = sbr.rel (%p299) target = $region20
        $region19: #{tpu_custom_call.1} parent=11 // pred_region
          _
        $region20: #{tpu_custom_call.1} parent=11 // pred_fallthru
          _
        // Predicated region
        $region21: #{tpu_custom_call.1} parent=11 // pred_check
          %p302 = pneg %p108
        $region22: #{tpu_custom_call.1} parent=11 // pred_check_branch
          %304 = sbr.rel (%p302) target = $region24
        $region23: #{tpu_custom_call.1} parent=11 // pred_region
          _
        $region24: #{tpu_custom_call.1} parent=11 // pred_fallthru
          _
        // Predicated region
        $region25: #{tpu_custom_call.1} parent=11 // pred_check
          %p305 = pneg %p129
        $region26: #{tpu_custom_call.1} parent=11 // pred_check_branch
          %307 = sbr.rel (%p305) target = $region28
        $region27: #{tpu_custom_call.1} parent=11 // pred_region
          _
        $region28: #{tpu_custom_call.1} parent=11 // pred_fallthru
          _
        // Predicated region
        $region29: #{tpu_custom_call.1} parent=11 // pred_check
          %p308 = pneg %p150
        $region30: #{tpu_custom_call.1} parent=11 // pred_check_branch
          %310 = sbr.rel (%p308) target = $region32
        $region31: #{tpu_custom_call.1} parent=11 // pred_region
          %s312 = ssub.s32 2048, 2048
          %313 = vsyncadd [#allocation3], %s312
          %s314 = sshll.u32 [#allocation2], 4
          %s315 = int_to_ptr.vmem [resolvable:$true] %s314
          %320 = dma.hbm_to_vmem [thread:$0]  %s5, 2048, %s315, [#allocation3], 128, 128, 8
        $region32: #{tpu_custom_call.1} parent=11 // pred_fallthru
          _
        // Predicated region
        $region33: #{tpu_custom_call.1} parent=11 // pred_check
          %p321 = pneg %p171
        $region34: #{tpu_custom_call.1} parent=11 // pred_check_branch
          %323 = sbr.rel (%p321) target = $region36
        $region35: #{tpu_custom_call.1} parent=11 // pred_region
          _
        $region36: #{tpu_custom_call.1} parent=11 // pred_fallthru
          _
        // Predicated region
        $region37: #{tpu_custom_call.1} parent=11 // pred_check
          %p324 = pneg %p192
        $region38: #{tpu_custom_call.1} parent=11 // pred_check_branch
          %326 = sbr.rel (%p324) target = $region40
        $region39: #{tpu_custom_call.1} parent=11 // pred_region
          %s328 = ssub.s32 2048, 2048
          %329 = vsyncadd [#allocation5], %s328
          %s330 = sshll.u32 [#allocation4], 4
          %s331 = int_to_ptr.vmem [resolvable:$true] %s330
          %336 = dma.hbm_to_vmem [thread:$0]  %s7, 2048, %s331, [#allocation5], 128, 128, 8
        $region40: #{tpu_custom_call.1} parent=11 // pred_fallthru
          _
        // Predicated region
        $region41: #{tpu_custom_call.1} parent=11 // pred_check
          %p337 = pneg %p213
        $region42: #{tpu_custom_call.1} parent=11 // pred_check_branch
          %339 = sbr.rel (%p337) target = $region44
        $region43: #{tpu_custom_call.1} parent=11 // pred_region
          _
        $region44: #{tpu_custom_call.1} parent=11 // pred_fallthru
          _
        // Predicated region
        $region45: #{tpu_custom_call.1} parent=11 // pred_check
          %p340 = pneg %p234
        $region46: #{tpu_custom_call.1} parent=11 // pred_check_branch
          %342 = sbr.rel (%p340) target = $region48
        $region47: #{tpu_custom_call.1} parent=11 // pred_region
          _
        $region48: #{tpu_custom_call.1} parent=11 // pred_fallthru
          _
        // Predicated region
        $region49: #{tpu_custom_call.1} parent=11 // pred_check
          %p343 = pneg %p255
        $region50: #{tpu_custom_call.1} parent=11 // pred_check_branch
          %345 = sbr.rel (%p343) target = $region52
        $region51: #{tpu_custom_call.1} parent=11 // pred_region
          _
        $region52: #{tpu_custom_call.1} parent=11 // pred_fallthru
          _
      $region12: #{tpu_custom_call.1} parent=5 // pred_fallthru
        _
      %p346 = scmp.lt.s32.totalorder %s19, 2
      // Predicated region
      $region53: #{tpu_custom_call.1} parent=5 // pred_check
        %p347 = pneg %p346
      $region54: #{tpu_custom_call.1} parent=5 // pred_check_branch
        %349 = sbr.rel (%p347) target = $region56
      $region55: #{tpu_custom_call.1} parent=5 // pred_region
        // Predicated region
        $region57: #{tpu_custom_call.1} parent=55 // pred_check
          %p350 = pneg %p39
        $region58: #{tpu_custom_call.1} parent=55 // pred_check_branch
          %352 = sbr.rel (%p350) target = $region60
        $region59: #{tpu_custom_call.1} parent=55 // pred_region
          %s353 = smul.u32 4, %s19
          %p354 = scmp.lt.s32.totalorder %s353, 7
          %s355 = scalar_select %p354, %s353, 7
          %s356 = smul.addr %s355, 8
          %s357 = scalar_lea.vmem %s0, %s356
          %s358 = smul.u32 4, %s19
        $region60: #{tpu_custom_call.1} parent=55 // pred_fallthru
          _
      $region56: #{tpu_custom_call.1} parent=5 // pred_fallthru
        _
      %p359 = scmp.le.s32.totalorder 1, %s19
      %p360 = scmp.lt.s32.totalorder %s19, 3
      %p361 = pnand %p359, %p360
      %p362 = pneg %p361
      // Predicated region
      $region61: #{tpu_custom_call.1} parent=5 // pred_check
        _
      $region62: #{tpu_custom_call.1} parent=5 // pred_check_branch
        %364 = sbr.rel (%p361) target = $region64
      $region63: #{tpu_custom_call.1} parent=5 // pred_region
        %s365 = ssub.s32 %s19, 1
        // Predicated region
        $region65: #{tpu_custom_call.1} parent=63 // pred_check
          %p366 = pneg %p150
        $region66: #{tpu_custom_call.1} parent=63 // pred_check_branch
          %368 = sbr.rel (%p366) target = $region68
        $region67: #{tpu_custom_call.1} parent=63 // pred_region
          %369 = dma.done [#allocation3], 2048
        $region68: #{tpu_custom_call.1} parent=63 // pred_fallthru
          _
        // Predicated region
        $region69: #{tpu_custom_call.1} parent=63 // pred_check
          %p370 = pneg %p192
        $region70: #{tpu_custom_call.1} parent=63 // pred_check_branch
          %372 = sbr.rel (%p370) target = $region72
        $region71: #{tpu_custom_call.1} parent=63 // pred_region
          %373 = dma.done [#allocation5], 2048
        $region72: #{tpu_custom_call.1} parent=63 // pred_fallthru
          _
        %s374 = smul.u32 4, %s24
        %p375 = scmp.lt.s32.totalorder %s374, 7
        %s376 = scalar_select %p375, %s374, 7
        %s377 = smul.addr %s376, 8
        %s378 = scalar_lea.vmem %s0, %s377
        %p379 = pneg %p45
        %p380 = pneg %p42
        %p381 = pneg %p66
        %p382 = pneg %p63
        %p383 = pneg %p87
        %p384 = pneg %p84
        %p385 = pneg %p108
        %p386 = pneg %p105
        %p387 = pneg %p129
        %p388 = pneg %p126
        %p389 = pneg %p150
        %p390 = pneg %p147
        %p391 = pneg %p171
        %p392 = pneg %p168
        %p393 = pneg %p192
        %p394 = pneg %p189
        %p395 = pneg %p213
        %p396 = pneg %p210
        %p397 = pneg %p234
        %p398 = pneg %p231
        %p399 = pneg %p255
        %p400 = pneg %p252
        %p401 = pneg %p281
        %p402 = pneg %p278
        %s403 = smul.u32 4, %s24
        %p404 = scmp.lt.s32.totalorder %s403, 7
        %s405 = scalar_select %p404, %s403, 7
        %s406 = smul.addr %s405, 8
        %s407 = scalar_lea.vmem %s11, %s406
        %s408 = smul.u32 4, %s24
        %p409 = scmp.lt.s32.totalorder %s408, 7
        %s410 = scalar_select %p409, %s408, 7
        %s411 = smul.addr %s410, 8
        %s412 = scalar_lea.vmem %s0, %s411
        %s413 = smul.u32 4, %s24
        %s414 = smul.u32 4, %s24
        %p415 = scmp.lt.s32.totalorder %s414, 7
        %s416 = scalar_select %p415, %s414, 7
        %s417 = smul.addr %s416, 8
        %s418 = scalar_lea.vmem %s11, %s417
        %s419 = smul.u32 4, %s24
        %v420 = vld [vmem:[%s412] sm:$0xff]
        %v421 = vld [vmem:[%s412 + $0x8] sm:$0xff]
        %v422 = vld [vmem:[%s412 + $0x10] sm:$0xff]
        %v423 = vld [vmem:[%s412 + $0x18] sm:$0xff]
        %v424 = vld [vmem:[%s1] sm:$0xf]
        %v425 = vld [vmem:[%s2] sm:$0x1]
        %v427 = vlaneseq
        %v428 = vshrl.u32 %v427, 7
        %v429 = vsub.s32 0, %v428
        %v430 = vrot.slane %v425, %v429
        %vm432 = vcmask 31744
        %v434 = vsel %vm432, %v420, 0
        %v437 = vsel %vm432, %v421, 0
        %v440 = vsel %vm432, %v422, 0
        %v443 = vsel %vm432, %v423, 0
        %vm445 = vcmask 1043456
        %v447 = vsel %vm445, %v424, 0
        %449 = vmatprep.subr.mxu0 0.0
        %450 = vmatpush1.msra.mxu0 %v447
        %451 = vmatprep.subr.mxu0 0.0
        %452 = vmatpush1.msra.mxu0 0.0
        %453 = vmatprep.subr.mxu0 0.0
        %454 = vmatpush1.msra.mxu0 0.0
        %455 = vmatprep.subr.mxu0 0.0
        %456 = vmatpush1.msra.mxu0 0.0
        %457 = vmatprep.subr.mxu0 0.0
        %458 = vmatpush1.msra.mxu0 0.0
        %459 = vmatprep.subr.mxu0 0.0
        %460 = vmatpush1.msra.mxu0 0.0
        %461 = vmatprep.subr.mxu0 0.0
        %462 = vmatpush1.msra.mxu0 0.0
        %463 = vmatprep.subr.mxu0 0.0
        %464 = vmatpush1.msra.mxu0 0.0
        %465 = vmatprep.subr.mxu0 0.0
        %466 = vmatpush1.msra.mxu0 0.0
        %467 = vmatprep.subr.mxu0 0.0
        %468 = vmatpush1.msra.mxu0 0.0
        %469 = vmatprep.subr.mxu0 0.0
        %470 = vmatpush1.msra.mxu0 0.0
        %471 = vmatprep.subr.mxu0 0.0
        %472 = vmatpush1.msra.mxu0 0.0
        %473 = vmatprep.subr.mxu0 0.0
        %474 = vmatpush1.msra.mxu0 0.0
        %475 = vmatprep.subr.mxu0 0.0
        %476 = vmatpush1.msra.mxu0 0.0
        %477 = vmatprep.subr.mxu0 0.0
        %478 = vmatpush1.msra.mxu0 0.0
        %479 = vmatprep.subr.mxu0 0.0
        %480 = vmatpush1.msra.mxu0 0.0
        %481 = vmatprep.subr.mxu0 0.0
        %482 = vmatpush1.msra.mxu0 0.0
        %483 = vmatprep.subr.mxu0 0.0
        %484 = vmatpush1.msra.mxu0 0.0
        %485 = vmatprep.subr.mxu0 0.0
        %486 = vmatpush1.msra.mxu0 0.0
        %487 = vmatprep.subr.mxu0 0.0
        %488 = vmatpush1.msra.mxu0 0.0
        %489 = vmatprep.subr.mxu0 0.0
        %490 = vmatpush1.msra.mxu0 0.0
        %491 = vmatprep.subr.mxu0 0.0
        %492 = vmatpush1.msra.mxu0 0.0
        %493 = vmatprep.subr.mxu0 0.0
        %494 = vmatpush1.msra.mxu0 0.0
        %495 = vmatprep.subr.mxu0 0.0
        %496 = vmatpush1.msra.mxu0 0.0
        %497 = vmatprep.subr.mxu0 0.0
        %498 = vmatpush1.msra.mxu0 0.0
        %499 = vmatprep.subr.mxu0 0.0
        %500 = vmatpush1.msra.mxu0 0.0
        %501 = vmatprep.subr.mxu0 0.0
        %502 = vmatpush1.msra.mxu0 0.0
        %503 = vmatprep.subr.mxu0 0.0
        %504 = vmatpush1.msra.mxu0 0.0
        %505 = vmatprep.subr.mxu0 0.0
        %506 = vmatpush1.msra.mxu0 0.0
        %507 = vmatprep.subr.mxu0 0.0
        %508 = vmatpush1.msra.mxu0 0.0
        %509 = vmatprep.subr.mxu0 0.0
        %510 = vmatpush1.msra.mxu0 0.0
        %511 = vmatprep.subr.mxu0 0.0
        %512 = vmatpush1.msra.mxu0 0.0
        %513 = vmatprep.mubr.f32.mxu0 0.0
        %514 = vmatmul.mubr.f32.gmra.mrb[0].mxu0 %v434
        %v515 = vpop.f32.mrb[0].mxu0
        %v516 = vadd.f32 %v430, %v515
        %v517 = vpop.f32.mrb[0].mxu0
        %518 = vmatprep.mubr.f32.mxu0 0.0
        %519 = vmatmul.mubr.f32.gmra.mrb[0].mxu0 %v437
        %v520 = vpop.f32.mrb[0].mxu0
        %v521 = vadd.f32 %v430, %v520
        %v522 = vpop.f32.mrb[0].mxu0
        %523 = vmatprep.mubr.f32.mxu0 0.0
        %524 = vmatmul.mubr.f32.gmra.mrb[0].mxu0 %v440
        %v525 = vpop.f32.mrb[0].mxu0
        %v526 = vadd.f32 %v430, %v525
        %v527 = vpop.f32.mrb[0].mxu0
        %528 = vmatprep.mubr.f32.mxu0 0.0
        %529 = vmatmul.mubr.f32.gmra.mrb[0].mxu0 %v443
        %v530 = vpop.f32.mrb[0].mxu0
        %v531 = vadd.f32 %v430, %v530
        %v532 = vpop.f32.mrb[0].mxu0
        %533 = vdwg.mxu0
        %v534 = vtanh.pop %v516
        %v535 = vtanh.pop %v521
        %v536 = vtanh.pop %v526
        %v537 = vtanh.pop %v531
        %v538 = vld [vmem:[%s3] sm:$0xff]
        %v539 = vld [vmem:[%s3 + $0x8] sm:$0xff]
        %v540 = vld [vmem:[%s3 + $0x10] sm:$0xff]
        %v541 = vld [vmem:[%s3 + $0x18] sm:$0xff]
        %v542 = vld [vmem:[%s3 + $0x20] sm:$0xff]
        %v543 = vld [vmem:[%s3 + $0x28] sm:$0xff]
        %v544 = vld [vmem:[%s3 + $0x30] sm:$0xff]
        %v545 = vld [vmem:[%s3 + $0x38] sm:$0xff]
        %v546 = vld [vmem:[%s3 + $0x40] sm:$0xff]
        %v547 = vld [vmem:[%s3 + $0x48] sm:$0xff]
        %v548 = vld [vmem:[%s3 + $0x50] sm:$0xff]
        %v549 = vld [vmem:[%s3 + $0x58] sm:$0xff]
        %v550 = vld [vmem:[%s3 + $0x60] sm:$0xff]
        %v551 = vld [vmem:[%s3 + $0x68] sm:$0xff]
        %v552 = vld [vmem:[%s3 + $0x70] sm:$0xff]
        %v553 = vld [vmem:[%s3 + $0x78] sm:$0xff]
        %v554 = vld [vmem:[%s4] sm:$0x1]
        %v556 = vlaneseq
        %v557 = vshrl.u32 %v556, 7
        %v558 = vsub.s32 0, %v557
        %v559 = vrot.slane %v554, %v558
        %561 = vmatprep.subr.mxu0 0.0
        %562 = vmatpush1.msra.mxu0 %v538
        %563 = vmatprep.subr.mxu0 0.0
        %564 = vmatpush1.msra.mxu0 %v539
        %565 = vmatprep.subr.mxu0 0.0
        %566 = vmatpush1.msra.mxu0 %v540
        %567 = vmatprep.subr.mxu0 0.0
        %568 = vmatpush1.msra.mxu0 %v541
        %569 = vmatprep.subr.mxu0 0.0
        %570 = vmatpush1.msra.mxu0 %v542
        %571 = vmatprep.subr.mxu0 0.0
        %572 = vmatpush1.msra.mxu0 %v543
        %573 = vmatprep.subr.mxu0 0.0
        %574 = vmatpush1.msra.mxu0 %v544
        %575 = vmatprep.subr.mxu0 0.0
        %576 = vmatpush1.msra.mxu0 %v545
        %577 = vmatprep.subr.mxu0 0.0
        %578 = vmatpush1.msra.mxu0 %v546
        %579 = vmatprep.subr.mxu0 0.0
        %580 = vmatpush1.msra.mxu0 %v547
        %581 = vmatprep.subr.mxu0 0.0
        %582 = vmatpush1.msra.mxu0 %v548
        %583 = vmatprep.subr.mxu0 0.0
        %584 = vmatpush1.msra.mxu0 %v549
        %585 = vmatprep.subr.mxu0 0.0
        %586 = vmatpush1.msra.mxu0 %v550
        %587 = vmatprep.subr.mxu0 0.0
        %588 = vmatpush1.msra.mxu0 %v551
        %589 = vmatprep.subr.mxu0 0.0
        %590 = vmatpush1.msra.mxu0 %v552
        %591 = vmatprep.subr.mxu0 0.0
        %592 = vmatpush1.msra.mxu0 %v553
        %593 = vmatprep.subr.mxu0 0.0
        %594 = vmatpush1.msra.mxu0 0.0
        %595 = vmatprep.subr.mxu0 0.0
        %596 = vmatpush1.msra.mxu0 0.0
        %597 = vmatprep.subr.mxu0 0.0
        %598 = vmatpush1.msra.mxu0 0.0
        %599 = vmatprep.subr.mxu0 0.0
        %600 = vmatpush1.msra.mxu0 0.0
        %601 = vmatprep.subr.mxu0 0.0
        %602 = vmatpush1.msra.mxu0 0.0
        %603 = vmatprep.subr.mxu0 0.0
        %604 = vmatpush1.msra.mxu0 0.0
        %605 = vmatprep.subr.mxu0 0.0
        %606 = vmatpush1.msra.mxu0 0.0
        %607 = vmatprep.subr.mxu0 0.0
        %608 = vmatpush1.msra.mxu0 0.0
        %609 = vmatprep.subr.mxu0 0.0
        %610 = vmatpush1.msra.mxu0 0.0
        %611 = vmatprep.subr.mxu0 0.0
        %612 = vmatpush1.msra.mxu0 0.0
        %613 = vmatprep.subr.mxu0 0.0
        %614 = vmatpush1.msra.mxu0 0.0
        %615 = vmatprep.subr.mxu0 0.0
        %616 = vmatpush1.msra.mxu0 0.0
        %617 = vmatprep.subr.mxu0 0.0
        %618 = vmatpush1.msra.mxu0 0.0
        %619 = vmatprep.subr.mxu0 0.0
        %620 = vmatpush1.msra.mxu0 0.0
        %621 = vmatprep.subr.mxu0 0.0
        %622 = vmatpush1.msra.mxu0 0.0
        %623 = vmatprep.subr.mxu0 0.0
        %624 = vmatpush1.msra.mxu0 0.0
        %625 = vmatprep.mubr.f32.mxu0 0.0
        %626 = vmatmul.mubr.f32.gmra.mrb[0].mxu0 %v534
        %v627 = vpop.f32.mrb[0].mxu0
        %v628 = vadd.f32 %v559, %v627
        %v629 = vpop.f32.mrb[0].mxu0
        %630 = vmatprep.mubr.f32.mxu0 0.0
        %631 = vmatmul.mubr.f32.gmra.mrb[0].mxu0 %v535
        %v632 = vpop.f32.mrb[0].mxu0
        %v633 = vadd.f32 %v559, %v632
        %v634 = vpop.f32.mrb[0].mxu0
        %635 = vmatprep.mubr.f32.mxu0 0.0
        %636 = vmatmul.mubr.f32.gmra.mrb[0].mxu0 %v536
        %v637 = vpop.f32.mrb[0].mxu0
        %v638 = vadd.f32 %v559, %v637
        %v639 = vpop.f32.mrb[0].mxu0
        %640 = vmatprep.mubr.f32.mxu0 0.0
        %641 = vmatmul.mubr.f32.gmra.mrb[0].mxu0 %v537
        %v642 = vpop.f32.mrb[0].mxu0
        %v643 = vadd.f32 %v559, %v642
        %v644 = vpop.f32.mrb[0].mxu0
        %645 = vdwg.mxu0
        %v646 = vtanh.pop %v628
        %v647 = vtanh.pop %v633
        %v648 = vtanh.pop %v638
        %v649 = vtanh.pop %v643
        %v650 = vld [vmem:[#allocation2] sm:$0xff]
        %v651 = vld [vmem:[#allocation2 + $0x8] sm:$0xff]
        %v652 = vld [vmem:[#allocation2 + $0x10] sm:$0xff]
        %v653 = vld [vmem:[#allocation2 + $0x18] sm:$0xff]
        %v654 = vld [vmem:[#allocation2 + $0x20] sm:$0xff]
        %v655 = vld [vmem:[#allocation2 + $0x28] sm:$0xff]
        %v656 = vld [vmem:[#allocation2 + $0x30] sm:$0xff]
        %v657 = vld [vmem:[#allocation2 + $0x38] sm:$0xff]
        %v658 = vld [vmem:[#allocation2 + $0x40] sm:$0xff]
        %v659 = vld [vmem:[#allocation2 + $0x48] sm:$0xff]
        %v660 = vld [vmem:[#allocation2 + $0x50] sm:$0xff]
        %v661 = vld [vmem:[#allocation2 + $0x58] sm:$0xff]
        %v662 = vld [vmem:[#allocation2 + $0x60] sm:$0xff]
        %v663 = vld [vmem:[#allocation2 + $0x68] sm:$0xff]
        %v664 = vld [vmem:[#allocation2 + $0x70] sm:$0xff]
        %v665 = vld [vmem:[#allocation2 + $0x78] sm:$0xff]
        %v666 = vld [vmem:[%s6] sm:$0x1]
        %v668 = vlaneseq
        %v669 = vshrl.u32 %v668, 7
        %v670 = vsub.s32 0, %v669
        %v671 = vrot.slane %v666, %v670
        %673 = vmatprep.subr.mxu0 0.0
        %674 = vmatpush1.msra.mxu0 %v650
        %675 = vmatprep.subr.mxu0 0.0
        %676 = vmatpush1.msra.mxu0 %v651
        %677 = vmatprep.subr.mxu0 0.0
        %678 = vmatpush1.msra.mxu0 %v652
        %679 = vmatprep.subr.mxu0 0.0
        %680 = vmatpush1.msra.mxu0 %v653
        %681 = vmatprep.subr.mxu0 0.0
        %682 = vmatpush1.msra.mxu0 %v654
        %683 = vmatprep.subr.mxu0 0.0
        %684 = vmatpush1.msra.mxu0 %v655
        %685 = vmatprep.subr.mxu0 0.0
        %686 = vmatpush1.msra.mxu0 %v656
        %687 = vmatprep.subr.mxu0 0.0
        %688 = vmatpush1.msra.mxu0 %v657
        %689 = vmatprep.subr.mxu0 0.0
        %690 = vmatpush1.msra.mxu0 %v658
        %691 = vmatprep.subr.mxu0 0.0
        %692 = vmatpush1.msra.mxu0 %v659
        %693 = vmatprep.subr.mxu0 0.0
        %694 = vmatpush1.msra.mxu0 %v660
        %695 = vmatprep.subr.mxu0 0.0
        %696 = vmatpush1.msra.mxu0 %v661
        %697 = vmatprep.subr.mxu0 0.0
        %698 = vmatpush1.msra.mxu0 %v662
        %699 = vmatprep.subr.mxu0 0.0
        %700 = vmatpush1.msra.mxu0 %v663
        %701 = vmatprep.subr.mxu0 0.0
        %702 = vmatpush1.msra.mxu0 %v664
        %703 = vmatprep.subr.mxu0 0.0
        %704 = vmatpush1.msra.mxu0 %v665
        %705 = vmatprep.subr.mxu0 0.0
        %706 = vmatpush1.msra.mxu0 0.0
        %707 = vmatprep.subr.mxu0 0.0
        %708 = vmatpush1.msra.mxu0 0.0
        %709 = vmatprep.subr.mxu0 0.0
        %710 = vmatpush1.msra.mxu0 0.0
        %711 = vmatprep.subr.mxu0 0.0
        %712 = vmatpush1.msra.mxu0 0.0
        %713 = vmatprep.subr.mxu0 0.0
        %714 = vmatpush1.msra.mxu0 0.0
        %715 = vmatprep.subr.mxu0 0.0
        %716 = vmatpush1.msra.mxu0 0.0
        %717 = vmatprep.subr.mxu0 0.0
        %718 = vmatpush1.msra.mxu0 0.0
        %719 = vmatprep.subr.mxu0 0.0
        %720 = vmatpush1.msra.mxu0 0.0
        %721 = vmatprep.subr.mxu0 0.0
        %722 = vmatpush1.msra.mxu0 0.0
        %723 = vmatprep.subr.mxu0 0.0
        %724 = vmatpush1.msra.mxu0 0.0
        %725 = vmatprep.subr.mxu0 0.0
        %726 = vmatpush1.msra.mxu0 0.0
        %727 = vmatprep.subr.mxu0 0.0
        %728 = vmatpush1.msra.mxu0 0.0
        %729 = vmatprep.subr.mxu0 0.0
        %730 = vmatpush1.msra.mxu0 0.0
        %731 = vmatprep.subr.mxu0 0.0
        %732 = vmatpush1.msra.mxu0 0.0
        %733 = vmatprep.subr.mxu0 0.0
        %734 = vmatpush1.msra.mxu0 0.0
        %735 = vmatprep.subr.mxu0 0.0
        %736 = vmatpush1.msra.mxu0 0.0
        %737 = vmatprep.mubr.f32.mxu0 0.0
        %738 = vmatmul.mubr.f32.gmra.mrb[0].mxu0 %v646
        %v739 = vpop.f32.mrb[0].mxu0
        %v740 = vadd.f32 %v671, %v739
        %v741 = vpop.f32.mrb[0].mxu0
        %742 = vmatprep.mubr.f32.mxu0 0.0
        %743 = vmatmul.mubr.f32.gmra.mrb[0].mxu0 %v647
        %v744 = vpop.f32.mrb[0].mxu0
        %v745 = vadd.f32 %v671, %v744
        %v746 = vpop.f32.mrb[0].mxu0
        %747 = vmatprep.mubr.f32.mxu0 0.0
        %748 = vmatmul.mubr.f32.gmra.mrb[0].mxu0 %v648
        %v749 = vpop.f32.mrb[0].mxu0
        %v750 = vadd.f32 %v671, %v749
        %v751 = vpop.f32.mrb[0].mxu0
        %752 = vmatprep.mubr.f32.mxu0 0.0
        %753 = vmatmul.mubr.f32.gmra.mrb[0].mxu0 %v649
        %v754 = vpop.f32.mrb[0].mxu0
        %v755 = vadd.f32 %v671, %v754
        %v756 = vpop.f32.mrb[0].mxu0
        %757 = vdwg.mxu0
        %v758 = vtanh.pop %v740
        %v759 = vtanh.pop %v745
        %v760 = vtanh.pop %v750
        %v761 = vtanh.pop %v755
        %v762 = vld [vmem:[#allocation4] sm:$0xff]
        %v763 = vld [vmem:[#allocation4 + $0x8] sm:$0xff]
        %v764 = vld [vmem:[#allocation4 + $0x10] sm:$0xff]
        %v765 = vld [vmem:[#allocation4 + $0x18] sm:$0xff]
        %v766 = vld [vmem:[#allocation4 + $0x20] sm:$0xff]
        %v767 = vld [vmem:[#allocation4 + $0x28] sm:$0xff]
        %v768 = vld [vmem:[#allocation4 + $0x30] sm:$0xff]
        %v769 = vld [vmem:[#allocation4 + $0x38] sm:$0xff]
        %v770 = vld [vmem:[#allocation4 + $0x40] sm:$0xff]
        %v771 = vld [vmem:[#allocation4 + $0x48] sm:$0xff]
        %v772 = vld [vmem:[#allocation4 + $0x50] sm:$0xff]
        %v773 = vld [vmem:[#allocation4 + $0x58] sm:$0xff]
        %v774 = vld [vmem:[#allocation4 + $0x60] sm:$0xff]
        %v775 = vld [vmem:[#allocation4 + $0x68] sm:$0xff]
        %v776 = vld [vmem:[#allocation4 + $0x70] sm:$0xff]
        %v777 = vld [vmem:[#allocation4 + $0x78] sm:$0xff]
        %v778 = vld [vmem:[%s8] sm:$0x1]
        %v780 = vlaneseq
        %v781 = vshrl.u32 %v780, 7
        %v782 = vsub.s32 0, %v781
        %v783 = vrot.slane %v778, %v782
        %785 = vmatprep.subr.mxu0 0.0
        %786 = vmatpush1.msra.mxu0 %v762
        %787 = vmatprep.subr.mxu0 0.0
        %788 = vmatpush1.msra.mxu0 %v763
        %789 = vmatprep.subr.mxu0 0.0
        %790 = vmatpush1.msra.mxu0 %v764
        %791 = vmatprep.subr.mxu0 0.0
        %792 = vmatpush1.msra.mxu0 %v765
        %793 = vmatprep.subr.mxu0 0.0
        %794 = vmatpush1.msra.mxu0 %v766
        %795 = vmatprep.subr.mxu0 0.0
        %796 = vmatpush1.msra.mxu0 %v767
        %797 = vmatprep.subr.mxu0 0.0
        %798 = vmatpush1.msra.mxu0 %v768
        %799 = vmatprep.subr.mxu0 0.0
        %800 = vmatpush1.msra.mxu0 %v769
        %801 = vmatprep.subr.mxu0 0.0
        %802 = vmatpush1.msra.mxu0 %v770
        %803 = vmatprep.subr.mxu0 0.0
        %804 = vmatpush1.msra.mxu0 %v771
        %805 = vmatprep.subr.mxu0 0.0
        %806 = vmatpush1.msra.mxu0 %v772
        %807 = vmatprep.subr.mxu0 0.0
        %808 = vmatpush1.msra.mxu0 %v773
        %809 = vmatprep.subr.mxu0 0.0
        %810 = vmatpush1.msra.mxu0 %v774
        %811 = vmatprep.subr.mxu0 0.0
        %812 = vmatpush1.msra.mxu0 %v775
        %813 = vmatprep.subr.mxu0 0.0
        %814 = vmatpush1.msra.mxu0 %v776
        %815 = vmatprep.subr.mxu0 0.0
        %816 = vmatpush1.msra.mxu0 %v777
        %817 = vmatprep.subr.mxu0 0.0
        %818 = vmatpush1.msra.mxu0 0.0
        %819 = vmatprep.subr.mxu0 0.0
        %820 = vmatpush1.msra.mxu0 0.0
        %821 = vmatprep.subr.mxu0 0.0
        %822 = vmatpush1.msra.mxu0 0.0
        %823 = vmatprep.subr.mxu0 0.0
        %824 = vmatpush1.msra.mxu0 0.0
        %825 = vmatprep.subr.mxu0 0.0
        %826 = vmatpush1.msra.mxu0 0.0
        %827 = vmatprep.subr.mxu0 0.0
        %828 = vmatpush1.msra.mxu0 0.0
        %829 = vmatprep.subr.mxu0 0.0
        %830 = vmatpush1.msra.mxu0 0.0
        %831 = vmatprep.subr.mxu0 0.0
        %832 = vmatpush1.msra.mxu0 0.0
        %833 = vmatprep.subr.mxu0 0.0
        %834 = vmatpush1.msra.mxu0 0.0
        %835 = vmatprep.subr.mxu0 0.0
        %836 = vmatpush1.msra.mxu0 0.0
        %837 = vmatprep.subr.mxu0 0.0
        %838 = vmatpush1.msra.mxu0 0.0
        %839 = vmatprep.subr.mxu0 0.0
        %840 = vmatpush1.msra.mxu0 0.0
        %841 = vmatprep.subr.mxu0 0.0
        %842 = vmatpush1.msra.mxu0 0.0
        %843 = vmatprep.subr.mxu0 0.0
        %844 = vmatpush1.msra.mxu0 0.0
        %845 = vmatprep.subr.mxu0 0.0
        %846 = vmatpush1.msra.mxu0 0.0
        %847 = vmatprep.subr.mxu0 0.0
        %848 = vmatpush1.msra.mxu0 0.0
        %849 = vmatprep.mubr.f32.mxu0 0.0
        %850 = vmatmul.mubr.f32.gmra.mrb[0].mxu0 %v758
        %v851 = vpop.f32.mrb[0].mxu0
        %v852 = vadd.f32 %v783, %v851
        %v853 = vpop.f32.mrb[0].mxu0
        %854 = vmatprep.mubr.f32.mxu0 0.0
        %855 = vmatmul.mubr.f32.gmra.mrb[0].mxu0 %v759
        %v856 = vpop.f32.mrb[0].mxu0
        %v857 = vadd.f32 %v783, %v856
        %v858 = vpop.f32.mrb[0].mxu0
        %859 = vmatprep.mubr.f32.mxu0 0.0
        %860 = vmatmul.mubr.f32.gmra.mrb[0].mxu0 %v760
        %v861 = vpop.f32.mrb[0].mxu0
        %v862 = vadd.f32 %v783, %v861
        %v863 = vpop.f32.mrb[0].mxu0
        %864 = vmatprep.mubr.f32.mxu0 0.0
        %865 = vmatmul.mubr.f32.gmra.mrb[0].mxu0 %v761
        %v866 = vpop.f32.mrb[0].mxu0
        %v867 = vadd.f32 %v783, %v866
        %v868 = vpop.f32.mrb[0].mxu0
        %869 = vdwg.mxu0
        %v870 = vtanh.pop %v852
        %v871 = vtanh.pop %v857
        %v872 = vtanh.pop %v862
        %v873 = vtanh.pop %v867
        %v874 = vld [vmem:[%s9] sm:$0xff]
        %v875 = vld [vmem:[%s9 + $0x8] sm:$0xff]
        %v876 = vld [vmem:[%s9 + $0x10] sm:$0xff]
        %v877 = vld [vmem:[%s9 + $0x18] sm:$0xff]
        %v878 = vld [vmem:[%s9 + $0x20] sm:$0xff]
        %v879 = vld [vmem:[%s9 + $0x28] sm:$0xff]
        %v880 = vld [vmem:[%s9 + $0x30] sm:$0xff]
        %v881 = vld [vmem:[%s9 + $0x38] sm:$0xff]
        %v882 = vld [vmem:[%s9 + $0x40] sm:$0xff]
        %v883 = vld [vmem:[%s9 + $0x48] sm:$0xff]
        %v884 = vld [vmem:[%s9 + $0x50] sm:$0xff]
        %v885 = vld [vmem:[%s9 + $0x58] sm:$0xff]
        %v886 = vld [vmem:[%s9 + $0x60] sm:$0xff]
        %v887 = vld [vmem:[%s9 + $0x68] sm:$0xff]
        %v888 = vld [vmem:[%s9 + $0x70] sm:$0xff]
        %v889 = vld [vmem:[%s9 + $0x78] sm:$0xff]
        %v890 = vld [vmem:[%s10] sm:$0x1]
        %v892 = vlaneseq
        %v893 = vshrl.u32 %v892, 7
        %v894 = vsub.s32 0, %v893
        %v895 = vrot.slane %v890, %v894
        %897 = vmatprep.subr.mxu0 0.0
        %898 = vmatpush1.msra.mxu0 %v874
        %899 = vmatprep.subr.mxu0 0.0
        %900 = vmatpush1.msra.mxu0 %v875
        %901 = vmatprep.subr.mxu0 0.0
        %902 = vmatpush1.msra.mxu0 %v876
        %903 = vmatprep.subr.mxu0 0.0
        %904 = vmatpush1.msra.mxu0 %v877
        %905 = vmatprep.subr.mxu0 0.0
        %906 = vmatpush1.msra.mxu0 %v878
        %907 = vmatprep.subr.mxu0 0.0
        %908 = vmatpush1.msra.mxu0 %v879
        %909 = vmatprep.subr.mxu0 0.0
        %910 = vmatpush1.msra.mxu0 %v880
        %911 = vmatprep.subr.mxu0 0.0
        %912 = vmatpush1.msra.mxu0 %v881
        %913 = vmatprep.subr.mxu0 0.0
        %914 = vmatpush1.msra.mxu0 %v882
        %915 = vmatprep.subr.mxu0 0.0
        %916 = vmatpush1.msra.mxu0 %v883
        %917 = vmatprep.subr.mxu0 0.0
        %918 = vmatpush1.msra.mxu0 %v884
        %919 = vmatprep.subr.mxu0 0.0
        %920 = vmatpush1.msra.mxu0 %v885
        %921 = vmatprep.subr.mxu0 0.0
        %922 = vmatpush1.msra.mxu0 %v886
        %923 = vmatprep.subr.mxu0 0.0
        %924 = vmatpush1.msra.mxu0 %v887
        %925 = vmatprep.subr.mxu0 0.0
        %926 = vmatpush1.msra.mxu0 %v888
        %927 = vmatprep.subr.mxu0 0.0
        %928 = vmatpush1.msra.mxu0 %v889
        %929 = vmatprep.subr.mxu0 0.0
        %930 = vmatpush1.msra.mxu0 0.0
        %931 = vmatprep.subr.mxu0 0.0
        %932 = vmatpush1.msra.mxu0 0.0
        %933 = vmatprep.subr.mxu0 0.0
        %934 = vmatpush1.msra.mxu0 0.0
        %935 = vmatprep.subr.mxu0 0.0
        %936 = vmatpush1.msra.mxu0 0.0
        %937 = vmatprep.subr.mxu0 0.0
        %938 = vmatpush1.msra.mxu0 0.0
        %939 = vmatprep.subr.mxu0 0.0
        %940 = vmatpush1.msra.mxu0 0.0
        %941 = vmatprep.subr.mxu0 0.0
        %942 = vmatpush1.msra.mxu0 0.0
        %943 = vmatprep.subr.mxu0 0.0
        %944 = vmatpush1.msra.mxu0 0.0
        %945 = vmatprep.subr.mxu0 0.0
        %946 = vmatpush1.msra.mxu0 0.0
        %947 = vmatprep.subr.mxu0 0.0
        %948 = vmatpush1.msra.mxu0 0.0
        %949 = vmatprep.subr.mxu0 0.0
        %950 = vmatpush1.msra.mxu0 0.0
        %951 = vmatprep.subr.mxu0 0.0
        %952 = vmatpush1.msra.mxu0 0.0
        %953 = vmatprep.subr.mxu0 0.0
        %954 = vmatpush1.msra.mxu0 0.0
        %955 = vmatprep.subr.mxu0 0.0
        %956 = vmatpush1.msra.mxu0 0.0
        %957 = vmatprep.subr.mxu0 0.0
        %958 = vmatpush1.msra.mxu0 0.0
        %959 = vmatprep.subr.mxu0 0.0
        %960 = vmatpush1.msra.mxu0 0.0
        %961 = vmatprep.mubr.f32.mxu0 0.0
        %962 = vmatmul.mubr.f32.gmra.mrb[0].mxu0 %v870
        %v963 = vpop.f32.mrb[0].mxu0
        %v964 = vadd.f32 %v895, %v963
        %v965 = vpop.f32.mrb[0].mxu0
        %966 = vmatprep.mubr.f32.mxu0 0.0
        %967 = vmatmul.mubr.f32.gmra.mrb[0].mxu0 %v871
        %v968 = vpop.f32.mrb[0].mxu0
        %v969 = vadd.f32 %v895, %v968
        %v970 = vpop.f32.mrb[0].mxu0
        %971 = vmatprep.mubr.f32.mxu0 0.0
        %972 = vmatmul.mubr.f32.gmra.mrb[0].mxu0 %v872
        %v973 = vpop.f32.mrb[0].mxu0
        %v974 = vadd.f32 %v895, %v973
        %v975 = vpop.f32.mrb[0].mxu0
        %976 = vmatprep.mubr.f32.mxu0 0.0
        %977 = vmatmul.mubr.f32.gmra.mrb[0].mxu0 %v873
        %v978 = vpop.f32.mrb[0].mxu0
        %v979 = vadd.f32 %v895, %v978
        %v980 = vpop.f32.mrb[0].mxu0
        %981 = vdwg.mxu0
        %vm982 = vcmask 15360
        %983 = vst.msk [vmem:[%s418] sm:$0xff] %vm982, %v964
        %984 = vst.msk [vmem:[%s418 + $0x8] sm:$0xff] %vm982, %v969
        %985 = vst.msk [vmem:[%s418 + $0x10] sm:$0xff] %vm982, %v974
        %986 = vst.msk [vmem:[%s418 + $0x18] sm:$0xff] %vm982, %v979
        %s987 = smul.u32 4, %s24
        %p988 = scmp.lt.s32.totalorder %s987, 7
        %s989 = scalar_select %p988, %s987, 7
        %s990 = smul.addr %s989, 8
        %s991 = scalar_lea.vmem %s11, %s990
        // Predicated region
        $region73: #{tpu_custom_call.1} parent=63 // pred_check
          %p992 = pneg %p278
        $region74: #{tpu_custom_call.1} parent=63 // pred_check_branch
          %994 = sbr.rel (%p992) target = $region76
        $region75: #{tpu_custom_call.1} parent=63 // pred_region
          %s995 = smul.u32 4, %s24
        $region76: #{tpu_custom_call.1} parent=63 // pred_fallthru
          _
      $region64: #{tpu_custom_call.1} parent=5 // pred_fallthru
        _
      %p996 = scmp.le.s32.totalorder 2, %s19
      // Predicated region
      $region77: #{tpu_custom_call.1} parent=5 // pred_check
        %p997 = pneg %p996
      $region78: #{tpu_custom_call.1} parent=5 // pred_check_branch
        %999 = sbr.rel (%p997) target = $region80
      $region79: #{tpu_custom_call.1} parent=5 // pred_region
        %s1000 = ssub.s32 %s19, 2
        // Predicated region
        $region81: #{tpu_custom_call.1} parent=79 // pred_check
          %p1001 = pneg %p284
        $region82: #{tpu_custom_call.1} parent=79 // pred_check_branch
          %1003 = sbr.rel (%p1001) target = $region84
        $region83: #{tpu_custom_call.1} parent=79 // pred_region
          %s1004 = smul.u32 4, %s25
          %p1005 = scmp.lt.s32.totalorder %s1004, 7
          %s1006 = scalar_select %p1005, %s1004, 7
          %s1007 = smul.addr %s1006, 8
          %s1008 = scalar_lea.vmem %s11, %s1007
        $region84: #{tpu_custom_call.1} parent=79 // pred_fallthru
          _
      $region80: #{tpu_custom_call.1} parent=5 // pred_fallthru
        _
    $region6: #{tpu_custom_call.1} parent=1 // loop_footer
      %s23 = sadd.s32 1, %s19
    $region7: #{tpu_custom_call.1} parent=1 // loop_footer_branch
      %18 = sbr.rel target = $region3
    $region8: #{tpu_custom_call.1} parent=1 // loop_exit
      _
    %1009 = vsyncpa [#allocation3], 1
    %s1010 = scalar_lea.sflag [#allocation3], 1
    %1011 = vsyncpa %s1010, 1
    %1012 = vsyncpa [#allocation5], 1

</llo_original>
